<compile_context>
chip_gen: v6e
topology: v6e:2x2x1
jax: 0.10.0
libtpu: 0.0.40
codegen_flags: <defaults>
</compile_context>

<pallas_src>
import functools

import jax
import jax.numpy as jnp
from jax import lax
from jax.experimental import pallas as pl
from jax.experimental.pallas import tpu as pltpu


# ---------------------------------------------------------------------------
# One-time probe: pin pltpu.roll's rotation direction against jnp.roll.
# ---------------------------------------------------------------------------
@functools.cache
def _roll_matches_jnp_roll() -> bool:
    def probe_kernel(x_ref, o_ref):
        o_ref[...] = pltpu.roll(x_ref[...], 1, axis=1)

    x = jnp.arange(8 * 128, dtype=jnp.float32).reshape(8, 128)
    y = pl.pallas_call(
        probe_kernel, out_shape=jax.ShapeDtypeStruct((8, 128), jnp.float32)
    )(x)
    return bool(jnp.array_equal(y, jnp.roll(x, 1, axis=1)))


# ---------------------------------------------------------------------------
# Pallas kernel: full Grapher forward for `n_imgs` images per grid step
# (channel-first, flat HW)
# ---------------------------------------------------------------------------
def grapher_kernel(x_ref, w1_ref, b1_ref, wg_ref, bg_ref, w2_ref, b2_ref,
                   o_ref, cat_ref, *, K, H, W, n_imgs, roll_like_jnp):
    C = w1_ref.shape[0]
    HW = H * W

    def roll_flat(v, s):
        # jnp.roll(v, s, axis=1) semantics regardless of the HW convention.
        s = s % HW
        if not roll_like_jnp:
            s = (HW - s) % HW
        return pltpu.roll(v, s, axis=1)

    h_hops = list(range(K, H, K))      # compile-time constant shift sets
    w_hops = list(range(K, W, K))

    # Per-lane column index, shared by all images / hops. Kept at full (C,HW)
    # shape: the (1,HW) i1 sublane-broadcast inside where() is not guaranteed
    # to lower on all Mosaic versions and the cost difference is ~10 cycles.
    col = lax.broadcasted_iota(jnp.int32, (C, HW), 1) % W

    for b in range(n_imgs):            # static unroll; images are independent
        x = x_ref[b]                                        # (C, HW) float32

        # ---- fc1: 1x1 conv + folded BN (bf16 MXU operands, f32 accum) ----
        y1 = jnp.dot(w1_ref[...], x.astype(jnp.bfloat16),
                     preferred_element_type=jnp.float32) + b1_ref[...]

        # ---- MRConv4d: x_j = y1 - min over hops of roll(y1) ----
        # All rolls are independent absolute-shift rotates of y1 (XLU), folded
        # into two running mins (VPU) that are combined at the end; the min
        # with y1 itself reproduces the reference's max(0, .) seed.
        m_h = y1
        for i in h_hops:               # roll by i along H == flat roll by i*W
            m_h = jnp.minimum(m_h, roll_flat(y1, i * W))
        m_w = y1
        for i in w_hops:               # per-row roll by i == select of 2 flat rolls
            r = jnp.where(col >= i,
                          roll_flat(y1, i),
                          roll_flat(y1, HW - W + i))
            m_w = jnp.minimum(m_w, r)
        x_j = y1 - jnp.minimum(m_h, m_w)   # == max(0, max_i(y1 - roll_i(y1)))

        # ---- graph_conv.nn: 1x1 conv (2C->2C) + folded BN + GELU ----
        # concat([y1, x_j], channel) built by two aligned sublane stores into a
        # bf16 VMEM scratch -> one K=2C MXU matmul (instead of two K=C matmuls
        # plus an f32 add of partial products).
        cat_ref[b, 0:C, :] = y1.astype(jnp.bfloat16)
        cat_ref[b, C:2 * C, :] = x_j.astype(jnp.bfloat16)
        yg = jnp.dot(wg_ref[...], cat_ref[b],
                     preferred_element_type=jnp.float32) + bg_ref[...]
        # sigmoid-approx GELU: 2 VPU ops + 1 EUP op (vs ~8 VPU for tanh poly).
        yg = yg * jax.nn.sigmoid(1.702 * yg)

        # ---- fc2: 1x1 conv (2C->C) + folded BN, then residual add ----
        y2 = jnp.dot(w2_ref[...], yg.astype(jnp.bfloat16),
                     preferred_element_type=jnp.float32) + b2_ref[...]
        o_ref[b] = (y2 + x).astype(o_ref.dtype)


# ---------------------------------------------------------------------------
# Wrapper: parameter folding + pallas_call
# ---------------------------------------------------------------------------
def _fold_conv_bn(w_oi, b_o, gamma, beta, mean, var, eps=1e-5):
    """Fold Conv2d(1x1) + BatchNorm2d (eval) into a left-multiply matmul.

    Returns W (Cout, Cin) in bf16 (MXU operand) and bias (Cout, 1) in f32 so
    that y[(Cout, H*W)] = W @ x[(Cin, H*W)] + b.
    """
    scale = gamma / jnp.sqrt(var + eps)
    w = (w_oi * scale[:, None]).astype(jnp.bfloat16)
    b = ((b_o - mean) * scale + beta).reshape(-1, 1).astype(jnp.float32)
    return w, b


def grapher_forward(x_nchw, params, K=2, images_per_step=None):
    """Grapher forward.

    images_per_step controls the batch grid:
      * None / B (default): single grid step + in-kernel loop over the batch,
        removing the ~0.35us per-grid-step pipeline overhead on 1-TC v5e/v6e.
      * B // 2: two parallel grid steps, feeding both TensorCores on v7x.
    """
    B, C, H, W = x_nchw.shape
    HW = H * W
    if images_per_step is None:
        images_per_step = B
    assert B % images_per_step == 0
    grid_b = B // images_per_step

    # Channel-first flat layout: last dim H*W is lane-dense; reshape is free.
    x = x_nchw.reshape(B, C, HW).astype(jnp.float32)

    w1, b1 = _fold_conv_bn(params["fc1_w"], params["fc1_b"], *params["bn1"])
    wg, bg = _fold_conv_bn(params["g_w"], params["g_b"], *params["bng"])
    w2, b2 = _fold_conv_bn(params["fc2_w"], params["fc2_b"], *params["bn2"])

    kernel = functools.partial(
        grapher_kernel, K=K, H=H, W=W, n_imgs=images_per_step,
        roll_like_jnp=_roll_matches_jnp_roll())

    out = pl.pallas_call(
        kernel,
        out_shape=jax.ShapeDtypeStruct((B, C, HW), jnp.float32),
        grid=(grid_b,),
        in_specs=[
            pl.BlockSpec((images_per_step, C, HW), lambda g: (g, 0, 0)),
            pl.BlockSpec((C, C),         lambda g: (0, 0)),
            pl.BlockSpec((C, 1),         lambda g: (0, 0)),
            pl.BlockSpec((2 * C, 2 * C), lambda g: (0, 0)),
            pl.BlockSpec((2 * C, 1),     lambda g: (0, 0)),
            pl.BlockSpec((C, 2 * C),     lambda g: (0, 0)),
            pl.BlockSpec((C, 1),         lambda g: (0, 0)),
        ],
        out_specs=pl.BlockSpec((images_per_step, C, HW), lambda g: (g, 0, 0)),
        scratch_shapes=[pltpu.VMEM((images_per_step, 2 * C, HW), jnp.bfloat16)],
        compiler_params=pltpu.CompilerParams(
            dimension_semantics=("parallel",)),
        # TODO(synk): at full MobileViG resolutions do NOT tile the H*W axis —
        # the circular rolls need the whole flattened row. Scale by tiling
        # over B (and output-channel blocks for fc1/MRConv, or the 2C
        # contraction for graph_conv/fc2 once 2C >= 128), set vmem_limit_bytes
        # explicitly on v7x (64 MiB physical VMEM), and switch the activation
        # blocks to bf16 if the surrounding network runs in bf16.
    )(x, w1, b1, wg, bg, w2, b2)

    return out.reshape(B, C, H, W)


# ---------------------------------------------------------------------------
# Plain-JAX reference (direct transcription of the PyTorch forward, NCHW)
# ---------------------------------------------------------------------------
def grapher_reference(x, params, K=2, eps=1e-5):
    def conv1x1(x, w_oi, b_o):
        return jnp.einsum("bchw,oc->bohw", x, w_oi) + b_o[None, :, None, None]

    def bn(x, g, bta, m, v):
        inv = 1.0 / jnp.sqrt(v + eps)
        return ((x - m[None, :, None, None]) * inv[None, :, None, None]
                * g[None, :, None, None] + bta[None, :, None, None])

    def gelu(x):  # exact erf GELU, as in torch.nn.GELU()
        return 0.5 * x * (1.0 + jax.lax.erf(x / jnp.sqrt(2.0).astype(x.dtype)))

    shortcut = x
    x = bn(conv1x1(x, params["fc1_w"], params["fc1_b"]), *params["bn1"])

    B, C, H, W = x.shape
    x_j = jnp.zeros_like(x)
    for i in range(K, H, K):
        x_c = x - jnp.concatenate([x[:, :, -i:, :], x[:, :, :-i, :]], axis=2)
        x_j = jnp.maximum(x_j, x_c)
    for i in range(K, W, K):
        x_r = x - jnp.concatenate([x[:, :, :, -i:], x[:, :, :, :-i]], axis=3)
        x_j = jnp.maximum(x_j, x_r)
    x = jnp.concatenate([x, x_j], axis=1)

    x = gelu(bn(conv1x1(x, params["g_w"], params["g_b"]), *params["bng"]))
    x = bn(conv1x1(x, params["fc2_w"], params["fc2_b"]), *params["bn2"])
    return x + shortcut


# ---------------------------------------------------------------------------
# Deterministic parameter construction
# ---------------------------------------------------------------------------
def make_params(key, dim):
    ks = jax.random.split(key, 12)

    def w(k, o, i):  # (out, in) 1x1 conv weight
        return jax.random.normal(k, (o, i), jnp.float32) * 0.1

    def b(k, o):
        return jax.random.normal(k, (o,), jnp.float32) * 0.05

    def bn(k, c):
        k1, k2, k3, k4 = jax.random.split(k, 4)
        gamma = 1.0 + 0.1 * jax.random.normal(k1, (c,), jnp.float32)
        beta = 0.05 * jax.random.normal(k2, (c,), jnp.float32)
        mean = 0.05 * jax.random.normal(k3, (c,), jnp.float32)
        var = jax.random.uniform(k4, (c,), jnp.float32, 0.5, 1.5)
        return (gamma, beta, mean, var)

    d2 = 2 * dim
    return {
        "fc1_w": w(ks[0], dim, dim), "fc1_b": b(ks[1], dim),
        "bn1": bn(ks[2], dim),
        "g_w": w(ks[3], d2, d2), "g_b": b(ks[4], d2),
        "bng": bn(ks[5], d2),
        "fc2_w": w(ks[6], dim, d2), "fc2_b": b(ks[7], dim),
        "bn2": bn(ks[8], dim),
    }


# ---------------------------------------------------------------------------
if __name__ == "__main__":
    key = jax.random.PRNGKey(0)
    # (B, dim, H, W, K): the K=3 config has a negation-asymmetric hop set
    # (pins the roll direction); the H != W config pins the H/W axis mapping.
    configs = [(2, 32, 16, 16, 2), (2, 32, 16, 16, 3), (2, 32, 8, 16, 2)]

    for B, dim, H, W, K in configs:
        key, kx, kp = jax.random.split(key, 3)
        x = jax.random.normal(kx, (B, dim, H, W), jnp.float32)
        params = make_params(kp, dim)

        out = jax.block_until_ready(grapher_forward(x, params, K=K))
        ref = grapher_reference(x, params, K=K)

        assert out.shape == (B, dim, H, W), out.shape
        # bf16 MXU operands + sigmoid-approx GELU (|err| up to ~2e-2 per
        # pre-fc2 activation) vs the exact f32 / erf-GELU reference ->
        # relaxed tolerance.
        assert jnp.allclose(out, ref, rtol=5e-2, atol=6e-2), (
            (B, dim, H, W, K), float(jnp.max(jnp.abs(out - ref))))

    print("KERNEL_OK")
</pallas_src>

<mosaic_0001>
module attributes {stable_mosaic.version = 11 : i64} {
  func.func @probe_kernel(%arg0: memref<8x128xf32, #tpu.memory_space<vmem>>, %arg1: memref<8x128xf32, #tpu.memory_space<vmem>>) attributes {dimension_semantics = [], scalar_prefetch = 0 : i64, scratch_operands = 0 : i64, tpu.core_type = #tpu.core_type<tc>} {
    %c0 = arith.constant 0 : index
    %c0_0 = arith.constant 0 : index
    %0 = vector.load %arg0[%c0, %c0_0] : memref<8x128xf32, #tpu.memory_space<vmem>>, vector<8x128xf32>
    %c1_i32 = arith.constant 1 : i32
    %1 = tpu.dynamic_rotate %0 by %c1_i32 dim 1 : vector<8x128xf32>, i32 -> vector<8x128xf32>
    %c0_1 = arith.constant 0 : index
    %c0_2 = arith.constant 0 : index
    %2 = vector.load %arg1[%c0_1, %c0_2] : memref<8x128xf32, #tpu.memory_space<vmem>>, vector<8x128xf32>
    tpu.vector_store %arg1[%c0_1, %c0_2], %1 {strides = array<i32>} : memref<8x128xf32, #tpu.memory_space<vmem>>, vector<8x128xf32>,
    return
  }
}

</mosaic_0001>

<llo_original>
// kernel: tpu_custom_call.1
$region0: #{tpu_custom_call.1}
  #allocation0 [shape = 'u32[]', space=smem, size = 0x4, offset = 0x4, fixed_abs, tag = 'smem constant byte address 0x4 - core index']
  #allocation1 [shape = 'u32[144,128]{1,0:T(1,128)}', space=vmem, size = 0x12000, scoped, tag = 'internal scratch']
  %s0 = inlined_call_operand.hbm [shape: f32[8,128], index: 0, kind: input, shape index: {}]
  %s1 = inlined_call_operand.hbm [shape: f32[8,128], index: 1, kind: output, shape index: {}]
  %s2 = sld [smem:[#allocation0]]
  $region18: #{tpu_custom_call.1} parent=0
    _
  %s4 = ssub.s32 1, %s2
  %s5 = scalar_select 0, %s4, %s2
  $region1: #{tpu_custom_call.1} parent=0
    #allocation2 [shape = 'u8[4096]{0}', space=vmem, size = 0x1000, scoped, tag = 'input window, operand 0, single buffered']
    #allocation3 [shape = 's32[1]{0}', space=sflag, size = 0x4, scoped, tag = 'scoped memory for tpu_custom_call.1']
    #allocation4 [shape = 's32[1]{0}', space=sflag, size = 0x4, scoped, tag = 'scoped memory for tpu_custom_call.1']
    #allocation5 [shape = 'u8[4096]{0}', space=vmem, size = 0x1000, scoped, tag = 'output window, operand 0, single buffered']
    %6 = vsyncpa [#allocation3], 0
    %7 = vsyncpa [#allocation4], 0
    // Predicated region
    $region2: #{tpu_custom_call.1} parent=1 // pred_check
      _
    $region3: #{tpu_custom_call.1} parent=1 // pred_check_branch
      %9 = sbr.rel (0) target = $region5
    $region4: #{tpu_custom_call.1} parent=1 // pred_region
      %s11 = ssub.s32 128, 128
      %12 = vsyncadd [#allocation3], %s11
      %s14 = sshll.u32 [#allocation2], 4
      %s15 = int_to_ptr.vmem [resolvable:$true] %s14
      %17 = dma.hbm_to_vmem [thread:$0]  %s0, 128, %s15, [#allocation3]
    $region5: #{tpu_custom_call.1} parent=1 // pred_fallthru
      _
    // Predicated region
    $region6: #{tpu_custom_call.1} parent=1 // pred_check
      _
    $region7: #{tpu_custom_call.1} parent=1 // pred_check_branch
      %19 = sbr.rel (0) target = $region9
    $region8: #{tpu_custom_call.1} parent=1 // pred_region
      %20 = dma.done [#allocation3], 128
    $region9: #{tpu_custom_call.1} parent=1 // pred_fallthru
      _
    %v21 = vld [vmem:[#allocation2] sm:$0xff]
    %22 = vrot.lane.b32.xlu0 %v21, 1
    %v23 = vpop.permute.xlu0 %22
    %24 = vst [vmem:[#allocation5] sm:$0xff] %v23
    // Predicated region
    $region10: #{tpu_custom_call.1} parent=1 // pred_check
      _
    $region11: #{tpu_custom_call.1} parent=1 // pred_check_branch
      %26 = sbr.rel (0) target = $region13
    $region12: #{tpu_custom_call.1} parent=1 // pred_region
      %s28 = ssub.s32 128, 128
      %29 = vsyncadd [#allocation4], %s28
      %s31 = sshll.u32 [#allocation5], 4
      %s32 = int_to_ptr.vmem [resolvable:$true] %s31
      %34 = dma.vmem_to_hbm [thread:$0]  %s32, 128, %s1, [#allocation4]
    $region13: #{tpu_custom_call.1} parent=1 // pred_fallthru
      _
    // Predicated region
    $region14: #{tpu_custom_call.1} parent=1 // pred_check
      _
    $region15: #{tpu_custom_call.1} parent=1 // pred_check_branch
      %36 = sbr.rel (0) target = $region17
    $region16: #{tpu_custom_call.1} parent=1 // pred_region
      %37 = dma.done [#allocation4], 128
    $region17: #{tpu_custom_call.1} parent=1 // pred_fallthru
      _
    %38 = vsyncpa [#allocation3], 1
    %39 = vsyncpa [#allocation4], 1

</llo_original>
